<compile_context>
chip_gen: v6e
topology: v6e:2x2x1
jax: 0.10.0
libtpu: 0.0.40
codegen_flags: <defaults>
</compile_context>

<pallas_src>
import math
import functools

import jax
import jax.numpy as jnp
from jax.experimental import pallas as pl
from jax.experimental.pallas import tpu as pltpu


def _build_positional_embedding(max_len: int, embed_dim: int) -> jnp.ndarray:
    """Reproduces the (nonstandard) table from the PyTorch __init__ exactly.

    For column j even:  sin(pos / 10000 ** (2*j / D))
    For column j odd :  cos(pos / 10000 ** (2*j / D))
    (the odd columns use exponent 2*(i+1)/D where j = i+1, i.e. 2*j/D)
    """
    pos = jnp.arange(max_len, dtype=jnp.float32)[:, None]          # (L, 1)
    j = jnp.arange(embed_dim, dtype=jnp.float32)[None, :]          # (1, D)
    denom = jnp.power(jnp.float32(10000.0), 2.0 * j / embed_dim)   # (1, D)
    angle = pos / denom                                            # (L, D)
    is_even = (jnp.arange(embed_dim) % 2 == 0)[None, :]
    table = jnp.where(is_even, jnp.sin(angle), jnp.cos(angle))
    return table.astype(jnp.float32)                               # (L, D)


def _pos_embed_kernel(x_ref, pe_ref, o_ref, *, scale):
    # x_ref : (TB, CT) tile of the flattened (B, S*D) input.
    # pe_ref: (1,  CT) tile of the flattened (1, S*D) positional table,
    #         broadcast over the TB rows (batch).
    x = x_ref[...].astype(jnp.float32)
    pe = pe_ref[...].astype(jnp.float32)
    o_ref[...] = (x * scale + pe).astype(o_ref.dtype)


def positional_embedding_forward(x: jnp.ndarray, pe_table: jnp.ndarray) -> jnp.ndarray:
    """x: (B, S, D).  pe_table: (max_len, D).  Returns (B, S, D)."""
    B, S, D = x.shape
    scale = float(math.sqrt(D))

    # Lane-dense flattening (layout plumbing only; math unchanged).
    cols = S * D
    x2 = x.reshape(B, cols)
    pe2 = pe_table[:S, :].reshape(1, cols)

    # Row tile: full batch when small (block dim == full dim is legal),
    # otherwise sublane-aligned 8-row tiles (edge blocks are masked).
    TB = B if B < 8 else 8

    # Column tile: ~2 MiB per f32 x-tile, multiple of 128, capped at the
    # full extent (full-extent block is legal even when cols < 128).
    ct_target = max(128, ((2 << 20) // (4 * TB)) // 128 * 128)
    CT = cols if cols <= ct_target else ct_target

    n_col = pl.cdiv(cols, CT)
    n_row = pl.cdiv(B, TB)
    # Column axis outer, batch axis inner -> PE tile index constant across
    # consecutive inner steps (no redundant HBM re-reads of the table).
    grid = (n_col, n_row)

    # Double-buffered x + pe + out tiles, with headroom; stays within the
    # v7x 32 MiB scoped-VMEM budget.
    vmem_needed = 2 * 4 * (TB * CT + CT + TB * CT)
    vmem_limit = int(min(max(2 * vmem_needed, 16 << 20), 32 << 20))

    kernel = functools.partial(_pos_embed_kernel, scale=scale)
    out2 = pl.pallas_call(
        kernel,
        out_shape=jax.ShapeDtypeStruct((B, cols), x.dtype),
        grid=grid,
        in_specs=[
            pl.BlockSpec((TB, CT), lambda ci, ri: (ri, ci)),   # x tile
            pl.BlockSpec((1, CT), lambda ci, ri: (0, ci)),     # pe tile (batch-invariant)
        ],
        out_specs=pl.BlockSpec((TB, CT), lambda ci, ri: (ri, ci)),
        compiler_params=pltpu.CompilerParams(
            dimension_semantics=("parallel", "parallel"),
            vmem_limit_bytes=vmem_limit,
        ),
    )(x2, pe2)

    return out2.reshape(B, S, D)


if __name__ == "__main__":
    # Small shapes consistent with the module: batch=2, seq=8, embed_dim=32.
    B, S, D = 2, 8, 32
    max_len = 64  # deterministic, in-script table (module default is 1200)

    key = jax.random.PRNGKey(0)
    x = jax.random.normal(key, (B, S, D), dtype=jnp.float32)

    pe_table = _build_positional_embedding(max_len, D)

    out = positional_embedding_forward(x, pe_table)
    out = jax.block_until_ready(out)

    # Reference check in plain JAX (same math as the PyTorch forward).
    ref = x * math.sqrt(D) + pe_table[None, :S, :]
    assert out.shape == (B, S, D)
    assert jnp.allclose(out, ref, atol=1e-5, rtol=1e-5)

    print("KERNEL_OK")
</pallas_src>

<mosaic_0001>
module attributes {stable_mosaic.version = 11 : i64} {
  func.func @_pos_embed_kernel(%arg0: i32, %arg1: i32, %arg2: memref<2x256xf32, #tpu.memory_space<vmem>>, %arg3: memref<1x256xf32, #tpu.memory_space<vmem>>, %arg4: memref<2x256xf32, #tpu.memory_space<vmem>>) attributes {dimension_semantics = [#tpu.dimension_semantics<parallel>, #tpu.dimension_semantics<parallel>], iteration_bounds = array<i64: 1, 1>, scalar_prefetch = 0 : i64, scratch_operands = 0 : i64, tpu.core_type = #tpu.core_type<tc>, window_params = [{transform_indices = @transform_0, window_bounds = array<i64: 2, 256>}, {transform_indices = @transform_1, window_bounds = array<i64: 1, 256>}, {transform_indices = @transform_2, window_bounds = array<i64: 2, 256>}]} {
    %c0 = arith.constant 0 : index
    %c0_0 = arith.constant 0 : index
    %0 = vector.load %arg2[%c0, %c0_0] : memref<2x256xf32, #tpu.memory_space<vmem>>, vector<2x256xf32>
    %c0_1 = arith.constant 0 : index
    %c0_2 = arith.constant 0 : index
    %1 = vector.load %arg3[%c0_1, %c0_2] : memref<1x256xf32, #tpu.memory_space<vmem>>, vector<1x256xf32>
    %cst = arith.constant 5.65685415 : f32
    %2 = vector.broadcast %cst : f32 to vector<2x256xf32>
    %3 = arith.mulf %0, %2 : vector<2x256xf32>
    %4 = vector.broadcast %1 : vector<1x256xf32> to vector<2x256xf32>
    %5 = arith.addf %3, %4 : vector<2x256xf32>
    %c0_3 = arith.constant 0 : index
    %c0_4 = arith.constant 0 : index
    %6 = vector.load %arg4[%c0_3, %c0_4] : memref<2x256xf32, #tpu.memory_space<vmem>>, vector<2x256xf32>
    tpu.vector_store %arg4[%c0_3, %c0_4], %5 {strides = array<i32>} : memref<2x256xf32, #tpu.memory_space<vmem>>, vector<2x256xf32>,
    return
  }
  func.func @transform_0(%arg0: i32, %arg1: i32) -> (i32, i32) {
    %c0_i32 = arith.constant 0 : i32
    return %arg1, %arg0 : i32, i32
  }
  func.func @transform_1(%arg0: i32, %arg1: i32) -> (i32, i32) {
    %c0_i32 = arith.constant 0 : i32
    %c0_i32_0 = arith.constant 0 : i32
    return %c0_i32, %arg0 : i32, i32
  }
  func.func @transform_2(%arg0: i32, %arg1: i32) -> (i32, i32) {
    %c0_i32 = arith.constant 0 : i32
    return %arg1, %arg0 : i32, i32
  }
}

</mosaic_0001>

<llo_original>
// kernel: tpu_custom_call.1
$region0: #{tpu_custom_call.1}
  #allocation0 [shape = 'u32[]', space=smem, size = 0x4, offset = 0x4, fixed_abs, tag = 'smem constant byte address 0x4 - core index']
  #allocation1 [shape = 'u32[144,128]{1,0:T(1,128)}', space=vmem, size = 0x12000, scoped, tag = 'internal scratch']
  %s0 = inlined_call_operand.hbm [shape: f32[2,256], index: 0, kind: input, shape index: {}]
  %s1 = inlined_call_operand.hbm [shape: f32[1,256], index: 1, kind: input, shape index: {}]
  %s2 = inlined_call_operand.hbm [shape: f32[2,256], index: 2, kind: output, shape index: {}]
  %s3 = sld [smem:[#allocation0]]
  $region26: #{tpu_custom_call.1} parent=0
    _
  %s5 = ssub.s32 1, %s3
  %s6 = scalar_select 0, %s5, %s3
  $region1: #{tpu_custom_call.1} parent=0
    #allocation2 [shape = 'u8[2048]{0}', space=vmem, size = 0x800, scoped, tag = 'input window, operand 0, single buffered']
    #allocation3 [shape = 's32[1]{0}', space=sflag, size = 0x4, scoped, tag = 'scoped memory for tpu_custom_call.1']
    #allocation4 [shape = 's32[1]{0}', space=sflag, size = 0x4, scoped, tag = 'scoped memory for tpu_custom_call.1']
    #allocation5 [shape = 'u8[1024]{0}', space=vmem, size = 0x400, scoped, tag = 'input window, operand 1, single buffered']
    #allocation6 [shape = 's32[1]{0}', space=sflag, size = 0x4, scoped, tag = 'scoped memory for tpu_custom_call.1']
    #allocation7 [shape = 'u8[2048]{0}', space=vmem, size = 0x800, scoped, tag = 'output window, operand 0, single buffered']
    %7 = vsyncpa [#allocation3], 0
    %8 = vsyncpa [#allocation6], 0
    %9 = vsyncpa [#allocation4], 0
    // Predicated region
    $region2: #{tpu_custom_call.1} parent=1 // pred_check
      _
    $region3: #{tpu_custom_call.1} parent=1 // pred_check_branch
      %11 = sbr.rel (0) target = $region5
    $region4: #{tpu_custom_call.1} parent=1 // pred_region
      %s13 = ssub.s32 64, 64
      %14 = vsyncadd [#allocation3], %s13
      %s16 = sshll.u32 [#allocation2], 4
      %s17 = int_to_ptr.vmem [resolvable:$true] %s16
      %19 = dma.hbm_to_vmem [thread:$0]  %s0, 64, %s17, [#allocation3]
    $region5: #{tpu_custom_call.1} parent=1 // pred_fallthru
      _
    // Predicated region
    $region6: #{tpu_custom_call.1} parent=1 // pred_check
      _
    $region7: #{tpu_custom_call.1} parent=1 // pred_check_branch
      %21 = sbr.rel (0) target = $region9
    $region8: #{tpu_custom_call.1} parent=1 // pred_region
      %s23 = ssub.s32 32, 32
      %24 = vsyncadd [#allocation6], %s23
      %s26 = sshll.u32 [#allocation5], 4
      %s27 = int_to_ptr.vmem [resolvable:$true] %s26
      %29 = dma.hbm_to_vmem [thread:$0]  %s1, 32, %s27, [#allocation6]
    $region9: #{tpu_custom_call.1} parent=1 // pred_fallthru
      _
    // Predicated region
    $region10: #{tpu_custom_call.1} parent=1 // pred_check
      _
    $region11: #{tpu_custom_call.1} parent=1 // pred_check_branch
      %31 = sbr.rel (0) target = $region13
    $region12: #{tpu_custom_call.1} parent=1 // pred_region
      %32 = dma.done [#allocation3], 64
    $region13: #{tpu_custom_call.1} parent=1 // pred_fallthru
      _
    // Predicated region
    $region14: #{tpu_custom_call.1} parent=1 // pred_check
      _
    $region15: #{tpu_custom_call.1} parent=1 // pred_check_branch
      %34 = sbr.rel (0) target = $region17
    $region16: #{tpu_custom_call.1} parent=1 // pred_region
      %35 = dma.done [#allocation6], 32
    $region17: #{tpu_custom_call.1} parent=1 // pred_fallthru
      _
    %v36 = vld [vmem:[#allocation2] sm:$0xf]
    %v37 = vld [vmem:[#allocation5] sm:$0x3]
    %v38 = vmul.f32 %v36, 5.656854
    %v40 = vlaneseq
    %v41 = vshrl.u32 %v40, 7
    %v42 = vsub.s32 0, %v41
    %v43 = vrot.slane %v37, %v42
    %v44 = vlaneseq
    %v45 = vshrl.u32 %v44, 7
    %v46 = vsub.s32 1, %v45
    %v47 = vrot.slane %v37, %v46
    %v48 = vcombine.low %v43, %v47
    %v50 = vunpack.c.l.s4 1983009808
    %v51 = vunpack.c.0.s8 %v50
    %v52 = vlaneseq
    %v53 = vshrl.u32 %v52, 7
    %v54 = vsub.s32 %v51, %v53
    %v55 = vrot.slane %v48, %v54
    %v57 = vadd.f32 %v38, %v55
    %58 = vst [vmem:[#allocation7] sm:$0xf] %v57
    // Predicated region
    $region18: #{tpu_custom_call.1} parent=1 // pred_check
      _
    $region19: #{tpu_custom_call.1} parent=1 // pred_check_branch
      %60 = sbr.rel (0) target = $region21
    $region20: #{tpu_custom_call.1} parent=1 // pred_region
      %s62 = ssub.s32 64, 64
      %63 = vsyncadd [#allocation4], %s62
      %s65 = sshll.u32 [#allocation7], 4
      %s66 = int_to_ptr.vmem [resolvable:$true] %s65
      %68 = dma.vmem_to_hbm [thread:$0]  %s66, 64, %s2, [#allocation4]
    $region21: #{tpu_custom_call.1} parent=1 // pred_fallthru
      _
    // Predicated region
    $region22: #{tpu_custom_call.1} parent=1 // pred_check
      _
    $region23: #{tpu_custom_call.1} parent=1 // pred_check_branch
      %70 = sbr.rel (0) target = $region25
    $region24: #{tpu_custom_call.1} parent=1 // pred_region
      %71 = dma.done [#allocation4], 64
    $region25: #{tpu_custom_call.1} parent=1 // pred_fallthru
      _
    %72 = vsyncpa [#allocation3], 1
    %73 = vsyncpa [#allocation6], 1
    %74 = vsyncpa [#allocation4], 1

</llo_original>
